<compile_context>
chip_gen: v6e
topology: v6e:2x2x1
jax: 0.10.0
libtpu: 0.0.40
codegen_flags: <defaults>
</compile_context>

<pallas_src>
import functools

import jax
import jax.numpy as jnp
from jax.experimental import pallas as pl
from jax.experimental.pallas import tpu as pltpu

_NEG_SLOPE = 0.2                 # LeakyReLU slope used by GATConv


def _vmem_limit_bytes():
    """Generation-aware scoped-VMEM limit (leave ~25% headroom for the compiler).

    v5e/v6e: 128 MiB physical  -> ~96 MiB scoped.
    v7x:      64 MiB *per TC*  -> ~48 MiB scoped (both TCs hold their own
              resident copies of W / h / s_srcT under "parallel" grid axes).
    """
    cap = 64 * 1024 * 1024
    try:
        cap = pltpu.get_tpu_info().vmem_capacity_bytes
    except Exception:
        pass
    return int(cap * 3 // 4)


# ----------------------------------------------------------------------------
# Pallas kernels
# ----------------------------------------------------------------------------
def _transform_kernel(x_ref, w_ref, wa_ref, h_ref, s_dst_ref, s_src_ref, *, heads):
    """Feature transform + attention-score projection for one row tile.

    h = x @ W                  (bf16 MXU inputs, f32 accumulation)
    s = x @ (W @ A)            WA precomputed & pre-cast in the wrapper; col h
                               -> a_dst.h, col heads+h -> a_src.h.
    Both matmuls read the same bf16 x tile (no h->s MXU-FIFO dependency).
    """
    x = x_ref[...]                                                  # (tm, F_in) bf16
    h = jnp.dot(x, w_ref[...], preferred_element_type=jnp.float32)  # (tm, H) f32
    s = jnp.dot(x, wa_ref[...], preferred_element_type=jnp.float32)  # (tm, 2*heads)
    h_ref[...] = h.astype(h_ref.dtype)                              # bf16 (agg RHS)
    s_dst_ref[...] = s[:, :heads]
    s_src_ref[...] = s[:, heads:]


def _attn_aggregate_kernel(s_dst_ref, s_srcT_ref, adj_ref, h_ref, *rest,
                           heads, f_out, concat, fuse_bn_relu, out_pad):
    """Masked attention softmax + neighbor aggregation for one target-row tile.

    Optional fused epilogue: BatchNorm1d(eval) folded to per-channel affine + ReLU.
    """
    if fuse_bn_relu:
        scale_ref, shift_ref, out_ref = rest
    else:
        (out_ref,) = rest

    s_dst = s_dst_ref[...]                                     # (tm, heads) f32
    s_srcT = s_srcT_ref[...]                                   # (heads, N)  f32
    adj = adj_ref[...]                                         # (tm, N) bf16 stream
    mask = adj > 0                                             # bf16 compare, no f32 temp

    head_outs = []
    for hh in range(heads):                                    # static -> unrolled
        # e[i, j] = LeakyReLU(a_dst . h_i + a_src . h_j), softmax over sources j
        e = s_dst[:, hh:hh + 1] + s_srcT[hh:hh + 1, :]          # (tm, N) f32
        e = jnp.maximum(e, _NEG_SLOPE * e)                      # LeakyReLU (1 VPU op)
        e = jnp.where(mask, e, jnp.float32(-1e9))
        m = jnp.max(e, axis=-1, keepdims=True)
        # bf16 exponent: the EUP slot is the binding unit of this loop; bf16
        # roughly doubles EUP throughput on v6e/v7x and p feeds the MXU in bf16.
        p = jnp.exp((e - m).astype(jnp.bfloat16))               # (tm, N) bf16
        denom = jnp.sum(p.astype(jnp.float32), axis=-1, keepdims=True)  # (tm, 1)
        h_h = h_ref[:, hh * f_out:(hh + 1) * f_out]             # (N, f_out) bf16
        out_h = jnp.dot(p, h_h, preferred_element_type=jnp.float32)     # (tm, f_out)
        # Fold softmax normalization into the small result (EUP reciprocal),
        # instead of dividing the (tm, N) probabilities.
        out_h = out_h * pl.reciprocal(denom, approx=True)
        head_outs.append(out_h)

    if concat:
        y = jnp.concatenate(head_outs, axis=-1)                 # (tm, heads*f_out)
    else:
        y = head_outs[0]
        for o in head_outs[1:]:
            y = y + o
        y = y * jnp.float32(1.0 / heads)

    if fuse_bn_relu:
        # BatchNorm1d (eval, running stats) == per-channel affine, then ReLU.
        y = jnp.maximum(y * scale_ref[...] + shift_ref[...], 0.0)

    if out_pad:
        # Pad narrow outputs to a lane-dense (multiple-of-128) store; the
        # wrapper slices the logical width back out.
        y = jnp.concatenate(
            [y, jnp.zeros((y.shape[0], out_pad), y.dtype)], axis=-1)

    # Single lane-dense, full-width store (no masked partial stores).
    out_ref[...] = y.astype(out_ref.dtype)


# ----------------------------------------------------------------------------
# Wrappers
# ----------------------------------------------------------------------------
def gat_transform(x, w, wa, *, heads, tm):
    n, f_in = x.shape
    hdim = w.shape[1]
    return pl.pallas_call(
        functools.partial(_transform_kernel, heads=heads),
        out_shape=(jax.ShapeDtypeStruct((n, hdim), jnp.bfloat16),
                   jax.ShapeDtypeStruct((n, heads), jnp.float32),
                   jax.ShapeDtypeStruct((n, heads), jnp.float32)),
        grid=(n // tm,),
        in_specs=[pl.BlockSpec((tm, f_in), lambda i: (i, 0)),
                  pl.BlockSpec((f_in, hdim), lambda i: (0, 0)),        # resident bf16
                  pl.BlockSpec((f_in, 2 * heads), lambda i: (0, 0))],  # resident bf16
        out_specs=(pl.BlockSpec((tm, hdim), lambda i: (i, 0)),
                   pl.BlockSpec((tm, heads), lambda i: (i, 0)),
                   pl.BlockSpec((tm, heads), lambda i: (i, 0))),
        compiler_params=pltpu.CompilerParams(
            dimension_semantics=("parallel",),
            vmem_limit_bytes=_vmem_limit_bytes()),
    )(x, w, wa)


def gat_attention_aggregate(s_dst, s_srcT, adj, h, scale, shift, *,
                            heads, f_out, concat, tm, out_dtype):
    n = adj.shape[0]
    hdim = heads * f_out
    out_dim = hdim if concat else f_out
    # Lane-dense writeback: pad widths that are not a multiple of 128 (the
    # concat=False last layer, num_classes wide) and slice in the wrapper.
    out_width = out_dim if out_dim % 128 == 0 else ((out_dim + 127) // 128) * 128
    out_pad = out_width - out_dim
    fuse = scale is not None
    kernel = functools.partial(_attn_aggregate_kernel, heads=heads, f_out=f_out,
                               concat=concat, fuse_bn_relu=fuse, out_pad=out_pad)
    in_specs = [
        pl.BlockSpec((tm, heads), lambda i: (i, 0)),      # s_dst row tile
        pl.BlockSpec((heads, n), lambda i: (0, 0)),       # s_src^T resident (lane-major)
        pl.BlockSpec((tm, n), lambda i: (i, 0)),          # adj row tile (bf16 stream)
        pl.BlockSpec((n, hdim), lambda i: (0, 0)),        # h resident (bf16)
    ]
    args = [s_dst, s_srcT, adj, h]
    if fuse:
        in_specs += [pl.BlockSpec((1, hdim), lambda i: (0, 0)),
                     pl.BlockSpec((1, hdim), lambda i: (0, 0))]
        args += [scale, shift]
    out = pl.pallas_call(
        kernel,
        out_shape=jax.ShapeDtypeStruct((n, out_width), out_dtype),
        grid=(n // tm,),
        in_specs=in_specs,
        out_specs=pl.BlockSpec((tm, out_width), lambda i: (i, 0)),
        compiler_params=pltpu.CompilerParams(
            dimension_semantics=("parallel",),
            vmem_limit_bytes=_vmem_limit_bytes()),
    )(*args)
    return out if out_pad == 0 else out[:, :out_dim]


# ----------------------------------------------------------------------------
# Parameter construction (deterministic, synthetic)
# ----------------------------------------------------------------------------
def build_attn_matrix(a_src, a_dst):
    """Block-diagonal (heads*f_out, 2*heads) matrix so S = h @ A gives
    S[:, hh] = a_dst_hh . h_hh and S[:, heads+hh] = a_src_hh . h_hh."""
    heads, f_out = a_src.shape
    hdim = heads * f_out
    eye = jnp.eye(heads, dtype=jnp.float32)
    dst_block = (a_dst[:, :, None] * eye[:, None, :]).reshape(hdim, heads)
    src_block = (a_src[:, :, None] * eye[:, None, :]).reshape(hdim, heads)
    return jnp.concatenate([dst_block, src_block], axis=-1)


def make_params(key, *, num_feats, dim_hidden, num_classes, heads, num_layers):
    gat_params, bn_params = [], []
    in_dim = num_feats
    for layer in range(num_layers):
        last = layer == num_layers - 1
        f_out = num_classes if last else dim_hidden
        key, k_w, k_s, k_d = jax.random.split(key, 4)
        scale = 1.0 / jnp.sqrt(jnp.float32(in_dim))
        w = jax.random.normal(k_w, (in_dim, heads * f_out), jnp.float32) * scale
        a_src = jax.random.normal(k_s, (heads, f_out), jnp.float32) * 0.1
        a_dst = jax.random.normal(k_d, (heads, f_out), jnp.float32) * 0.1
        a_mat = build_attn_matrix(a_src, a_dst)
        # Fold the attention projection into the input side (WA = W @ A, tiny),
        # and pre-cast both weight matrices to bf16 once at parameter build time.
        gat_params.append({
            "w": w.astype(jnp.bfloat16),                         # (in_dim, heads*f_out)
            "wa": jnp.dot(w, a_mat).astype(jnp.bfloat16),        # (in_dim, 2*heads)
        })
        if not last:
            c = dim_hidden * heads
            bn_params.append({
                "gamma": jnp.ones((1, c), jnp.float32),   # BatchNorm1d default init
                "beta": jnp.zeros((1, c), jnp.float32),
                "mean": jnp.zeros((1, c), jnp.float32),   # running stats
                "var": jnp.ones((1, c), jnp.float32),
            })
            in_dim = c
    return {"gat": gat_params, "bn": bn_params}


def dmgat_forward(params, x, adj, *, heads, dim_hidden, num_classes, num_layers,
                  tm=128):
    n = x.shape[0]
    tm = min(tm, n)
    assert n % tm == 0, (n, tm)
    # {0,1} adjacency exactly representable in bf16; halves the dominant HBM
    # stream.  Activations are bf16 end-to-end (first cast here, every hidden
    # layer already emits bf16 after fused BN+ReLU).
    adj_bf16 = adj.astype(jnp.bfloat16)
    x = x.astype(jnp.bfloat16)
    # NOTE: for large graphs on v5e/v6e, tm=256/512 amortizes per-step overhead
    # better; keep the grid >= 2 so both v7x TensorCores get work.

    def layer(x, g, bn, f_out, concat, out_dtype):
        h, s_dst, s_src = gat_transform(x, g["w"], g["wa"], heads=heads, tm=tm)
        # s_src is (N, heads) f32 — tiny vs the N^2 adj stream; one lane-major
        # relayout per layer here (kept out of the kernel: a (tm, heads)
        # non-tile-aligned in-kernel transpose is a lowering risk for no
        # measurable bandwidth gain).
        s_srcT = jnp.transpose(s_src)
        if bn is not None:
            bn_scale = bn["gamma"] * jax.lax.rsqrt(bn["var"] + 1e-5)
            bn_shift = bn["beta"] - bn["mean"] * bn_scale
        else:
            bn_scale = bn_shift = None
        return gat_attention_aggregate(s_dst, s_srcT, adj_bf16, h,
                                       bn_scale, bn_shift, heads=heads,
                                       f_out=f_out, concat=concat, tm=tm,
                                       out_dtype=out_dtype)

    for i in range(num_layers - 1):
        # F.dropout(training=False) -> identity
        x = layer(x, params["gat"][i], params["bn"][i], dim_hidden, True,
                  jnp.bfloat16)
    x = layer(x, params["gat"][-1], None, num_classes, False, jnp.float32)
    return x


# ----------------------------------------------------------------------------
# Demo
# ----------------------------------------------------------------------------
if __name__ == "__main__":
    N = 256            # number of graph nodes (2 row tiles of 128)
    NUM_FEATS = 64
    DIM_HIDDEN = 32
    HEADS = 4          # hidden width = 128 -> lane-aligned
    NUM_CLASSES = 8
    NUM_LAYERS = 3

    key = jax.random.PRNGKey(0)
    key, kx, ka = jax.random.split(key, 3)

    x = jax.random.normal(kx, (N, NUM_FEATS), jnp.float32)

    # random symmetric adjacency with self loops, dense {0, 1}
    a = (jax.random.uniform(ka, (N, N)) < 0.05).astype(jnp.float32)
    adj = jnp.clip(a + a.T + jnp.eye(N, dtype=jnp.float32), 0.0, 1.0)

    params = make_params(key, num_feats=NUM_FEATS, dim_hidden=DIM_HIDDEN,
                         num_classes=NUM_CLASSES, heads=HEADS,
                         num_layers=NUM_LAYERS)

    out = dmgat_forward(params, x, adj, heads=HEADS, dim_hidden=DIM_HIDDEN,
                        num_classes=NUM_CLASSES, num_layers=NUM_LAYERS, tm=128)
    out = jax.block_until_ready(out)

    assert out.shape == (N, NUM_CLASSES), out.shape
    assert jnp.all(jnp.isfinite(out))
    print("KERNEL_OK")
</pallas_src>

<mosaic_0001>
module attributes {stable_mosaic.version = 11 : i64} {
  func.func @_transform_kernel(%arg0: i32, %arg1: memref<128x64xbf16, #tpu.memory_space<vmem>>, %arg2: memref<64x128xbf16, #tpu.memory_space<vmem>>, %arg3: memref<64x8xbf16, #tpu.memory_space<vmem>>, %arg4: memref<128x128xbf16, #tpu.memory_space<vmem>>, %arg5: memref<128x4xf32, #tpu.memory_space<vmem>>, %arg6: memref<128x4xf32, #tpu.memory_space<vmem>>) attributes {dimension_semantics = [#tpu.dimension_semantics<parallel>], iteration_bounds = array<i64: 2>, scalar_prefetch = 0 : i64, scratch_operands = 0 : i64, tpu.core_type = #tpu.core_type<tc>, window_params = [{transform_indices = @transform_0, window_bounds = array<i64: 128, 64>}, {pipeline_mode = #tpu.pipeline_mode<synchronous>, transform_indices = @transform_1, window_bounds = array<i64: 64, 128>}, {pipeline_mode = #tpu.pipeline_mode<synchronous>, transform_indices = @transform_2, window_bounds = array<i64: 64, 8>}, {transform_indices = @transform_3, window_bounds = array<i64: 128, 128>}, {transform_indices = @transform_4, window_bounds = array<i64: 128, 4>}, {transform_indices = @transform_5, window_bounds = array<i64: 128, 4>}]} {
    %c0 = arith.constant 0 : index
    %c0_0 = arith.constant 0 : index
    %0 = vector.load %arg1[%c0, %c0_0] : memref<128x64xbf16, #tpu.memory_space<vmem>>, vector<128x64xbf16>
    %c0_1 = arith.constant 0 : index
    %c0_2 = arith.constant 0 : index
    %1 = vector.load %arg2[%c0_1, %c0_2] : memref<64x128xbf16, #tpu.memory_space<vmem>>, vector<64x128xbf16>
    %cst = arith.constant dense<0.000000e+00> : vector<128x128xf32>
    %2 = tpu.matmul %0, %1, %cst {dimension_numbers = #tpu.dot_dimension_numbers<[1], [0], [0], [1], [0, 0, 1, 1], [], []>} : vector<128x64xbf16>, vector<64x128xbf16>, vector<128x128xf32> -> vector<128x128xf32>
    %c0_3 = arith.constant 0 : index
    %c0_4 = arith.constant 0 : index
    %3 = vector.load %arg3[%c0_3, %c0_4] : memref<64x8xbf16, #tpu.memory_space<vmem>>, vector<64x8xbf16>
    %cst_5 = arith.constant dense<0.000000e+00> : vector<128x8xf32>
    %4 = tpu.matmul %0, %3, %cst_5 {dimension_numbers = #tpu.dot_dimension_numbers<[1], [0], [0], [1], [0, 0, 1, 1], [], []>} : vector<128x64xbf16>, vector<64x8xbf16>, vector<128x8xf32> -> vector<128x8xf32>
    %5 = arith.truncf %2 : vector<128x128xf32> to vector<128x128xbf16>
    %c0_6 = arith.constant 0 : index
    %c0_7 = arith.constant 0 : index
    %6 = vector.load %arg4[%c0_6, %c0_7] : memref<128x128xbf16, #tpu.memory_space<vmem>>, vector<128x128xbf16>
    tpu.vector_store %arg4[%c0_6, %c0_7], %5 {strides = array<i32>} : memref<128x128xbf16, #tpu.memory_space<vmem>>, vector<128x128xbf16>,
    %7 = vector.extract_strided_slice %4 {offsets = [0, 0], sizes = [128, 4], strides = [1, 1]} : vector<128x8xf32> to vector<128x4xf32>
    %c0_8 = arith.constant 0 : index
    %c0_9 = arith.constant 0 : index
    %8 = vector.load %arg5[%c0_8, %c0_9] : memref<128x4xf32, #tpu.memory_space<vmem>>, vector<128x4xf32>
    tpu.vector_store %arg5[%c0_8, %c0_9], %7 {strides = array<i32>} : memref<128x4xf32, #tpu.memory_space<vmem>>, vector<128x4xf32>,
    %9 = vector.extract_strided_slice %4 {offsets = [0, 4], sizes = [128, 4], strides = [1, 1]} : vector<128x8xf32> to vector<128x4xf32>
    %c0_10 = arith.constant 0 : index
    %c0_11 = arith.constant 0 : index
    %10 = vector.load %arg6[%c0_10, %c0_11] : memref<128x4xf32, #tpu.memory_space<vmem>>, vector<128x4xf32>
    tpu.vector_store %arg6[%c0_10, %c0_11], %9 {strides = array<i32>} : memref<128x4xf32, #tpu.memory_space<vmem>>, vector<128x4xf32>,
    return
  }
  func.func @transform_0(%arg0: i32) -> (i32, i32) {
    %c0_i32 = arith.constant 0 : i32
    %c0_i32_0 = arith.constant 0 : i32
    return %arg0, %c0_i32 : i32, i32
  }
  func.func @transform_1(%arg0: i32) -> (i32, i32) {
    %c0_i32 = arith.constant 0 : i32
    %c0_i32_0 = arith.constant 0 : i32
    %c0_i32_1 = arith.constant 0 : i32
    return %c0_i32, %c0_i32_0 : i32, i32
  }
  func.func @transform_2(%arg0: i32) -> (i32, i32) {
    %c0_i32 = arith.constant 0 : i32
    %c0_i32_0 = arith.constant 0 : i32
    %c0_i32_1 = arith.constant 0 : i32
    return %c0_i32, %c0_i32_0 : i32, i32
  }
  func.func @transform_3(%arg0: i32) -> (i32, i32) {
    %c0_i32 = arith.constant 0 : i32
    %c0_i32_0 = arith.constant 0 : i32
    return %arg0, %c0_i32 : i32, i32
  }
  func.func @transform_4(%arg0: i32) -> (i32, i32) {
    %c0_i32 = arith.constant 0 : i32
    %c0_i32_0 = arith.constant 0 : i32
    return %arg0, %c0_i32 : i32, i32
  }
  func.func @transform_5(%arg0: i32) -> (i32, i32) {
    %c0_i32 = arith.constant 0 : i32
    %c0_i32_0 = arith.constant 0 : i32
    return %arg0, %c0_i32 : i32, i32
  }
}

</mosaic_0001>

<llo_original>
// kernel: tpu_custom_call.1
$region0: #{tpu_custom_call.1}
  #allocation0 [shape = 'u32[]', space=smem, size = 0x4, offset = 0x4, fixed_abs, tag = 'smem constant byte address 0x4 - core index']
  #allocation1 [shape = 'u32[144,128]{1,0:T(1,128)}', space=vmem, size = 0x12000, scoped, tag = 'internal scratch']
  %s0 = inlined_call_operand.vmem [shape: bf16[256,64], index: 0, kind: input, shape index: {}]
  %s1 = inlined_call_operand.vmem [shape: bf16[64,128], index: 1, kind: input, shape index: {}]
  %s2 = inlined_call_operand.vmem [shape: bf16[64,8], index: 2, kind: input, shape index: {}]
  %s3 = inlined_call_operand.hbm [shape: bf16[256,128], index: 3, kind: output, shape index: {0}]
  %s4 = inlined_call_operand.vmem [shape: f32[256,4], index: 4, kind: output, shape index: {1}]
  %s5 = inlined_call_operand.vmem [shape: f32[256,4], index: 5, kind: output, shape index: {2}]
  %6 = xla_tuple %s3, %s4, %s5
  %s7 = sld [smem:[#allocation0]]
  $region61: #{tpu_custom_call.1} parent=0
    _
  %s9 = ssub.s32 1, %s7
  %s10 = scalar_select 0, %s9, %s7
  $region1: #{tpu_custom_call.1} parent=0
    #allocation2 [shape = 'u8[65536]{0}', space=vmem, size = 0x10000, scoped, tag = 'output window, operand 0']
    #allocation3 [shape = 's32[2]{0}', space=sflag, size = 0x8, scoped, tag = 'scoped memory for tpu_custom_call.1']
    %11 = vsyncpa [#allocation3], 0
    %s12 = scalar_lea.sflag [#allocation3], 1
    %13 = vsyncpa %s12, 0
    loop: start=0, step=1, limit=4
    $region2: #{tpu_custom_call.1} parent=1 // loop_pre_header
      _
    $region3: #{tpu_custom_call.1} parent=1 // loop_header
      %s15 = sphi 0, %s19
      %p16 = scmp.ge.s32.totalorder %s15, 4
      %s25 = sphi 0, %s27
      %s28 = sphi 0, %s25
      %s29 = sphi 0, %s28
      %s45 = sphi 0, %s29
      %s49 = sphi 0, %s49
      %s51 = sphi 0, %s49
      %s52 = sphi 0, %s51
      %s66 = sphi 0, %s52
      %s70 = sphi 0, %s70
      %s72 = sphi 0, %s70
      %s73 = sphi 0, %s72
      %s87 = sphi 0, %s73
      %s93 = sphi 0, %s95
      %s96 = sphi 0, %s93
      %s97 = sphi 0, %s96
      %s113 = sphi 0, %s97
      %s119 = sphi 0, %s121
      %s122 = sphi 0, %s119
      %s123 = sphi 0, %s122
      %s139 = sphi 0, %s123
      %s145 = sphi 0, %s147
      %s148 = sphi 0, %s145
      %s149 = sphi 0, %s148
      %s165 = sphi 0, %s149
    $region4: #{tpu_custom_call.1} parent=1 // loop_header_branch
      %18 = sbr.rel (%p16) target = $region8
    $region5: #{tpu_custom_call.1} parent=1 // loop_body
      %s20 = ssub.s32 %s15, 1
      %s21 = ssub.s32 %s15, 2
      %s22 = sadd.s32 %s15, 1
      %s23 = ssub.s32 %s15, %s22
      %p24 = scmp.eq.s32.totalorder %s23, 0
      %s26 = sadd.s32 %s25, 1
      %s27 = scalar_select %p24, %s25, %s26
      %p30 = pneg %p24
      %p31 = scmp.eq.s32.totalorder %s15, 1
      %p32 = por %p30, %p31
      %p33 = scmp.ne.s32.totalorder %s25, %s28
      %p34 = scmp.eq.s32.totalorder %s15, 0
      %p35 = por %p33, %p34
      %p36 = scmp.ne.s32.totalorder %s25, %s28
      %p37 = scmp.eq.s32.totalorder %s20, 1
      %p38 = por %p36, %p37
      %p39 = scmp.ne.s32.totalorder %s28, %s29
      %p40 = scmp.eq.s32.totalorder %s20, 0
      %p41 = por %p39, %p40
      %p42 = scmp.ne.s32.totalorder %s28, %s29
      %p43 = scmp.eq.s32.totalorder %s21, 1
      %p44 = por %p42, %p43
      %p46 = scmp.ne.s32.totalorder %s29, %s45
      %p47 = scmp.eq.s32.totalorder %s21, 0
      %p48 = por %p46, %p47
      %s50 = sadd.s32 %s49, 1
      %p53 = scmp.eq.s32.totalorder %s15, 1
      %p54 = scmp.ne.s32.totalorder %s49, %s51
      %p55 = scmp.eq.s32.totalorder %s15, 0
      %p56 = por %p54, %p55
      %p57 = scmp.ne.s32.totalorder %s49, %s51
      %p58 = scmp.eq.s32.totalorder %s20, 1
      %p59 = por %p57, %p58
      %p60 = scmp.ne.s32.totalorder %s51, %s52
      %p61 = scmp.eq.s32.totalorder %s20, 0
      %p62 = por %p60, %p61
      %p63 = scmp.ne.s32.totalorder %s51, %s52
      %p64 = scmp.eq.s32.totalorder %s21, 1
      %p65 = por %p63, %p64
      %p67 = scmp.ne.s32.totalorder %s52, %s66
      %p68 = scmp.eq.s32.totalorder %s21, 0
      %p69 = por %p67, %p68
      %s71 = sadd.s32 %s70, 1
      %p74 = scmp.eq.s32.totalorder %s15, 1
      %p75 = scmp.ne.s32.totalorder %s70, %s72
      %p76 = scmp.eq.s32.totalorder %s15, 0
      %p77 = por %p75, %p76
      %p78 = scmp.ne.s32.totalorder %s70, %s72
      %p79 = scmp.eq.s32.totalorder %s20, 1
      %p80 = por %p78, %p79
      %p81 = scmp.ne.s32.totalorder %s72, %s73
      %p82 = scmp.eq.s32.totalorder %s20, 0
      %p83 = por %p81, %p82
      %p84 = scmp.ne.s32.totalorder %s72, %s73
      %p85 = scmp.eq.s32.totalorder %s21, 1
      %p86 = por %p84, %p85
      %p88 = scmp.ne.s32.totalorder %s73, %s87
      %p89 = scmp.eq.s32.totalorder %s21, 0
      %p90 = por %p88, %p89
      %s91 = ssub.s32 %s15, %s22
      %p92 = scmp.eq.s32.totalorder %s91, 0
      %s94 = sadd.s32 %s93, 1
      %s95 = scalar_select %p92, %s93, %s94
      %p98 = pneg %p92
      %p99 = scmp.eq.s32.totalorder %s15, 1
      %p100 = por %p98, %p99
      %p101 = scmp.ne.s32.totalorder %s93, %s96
      %p102 = scmp.eq.s32.totalorder %s15, 0
      %p103 = por %p101, %p102
      %p104 = scmp.ne.s32.totalorder %s93, %s96
      %p105 = scmp.eq.s32.totalorder %s20, 1
      %p106 = por %p104, %p105
      %p107 = scmp.ne.s32.totalorder %s96, %s97
      %p108 = scmp.eq.s32.totalorder %s20, 0
      %p109 = por %p107, %p108
      %p110 = scmp.ne.s32.totalorder %s96, %s97
      %p111 = scmp.eq.s32.totalorder %s21, 1
      %p112 = por %p110, %p111
      %p114 = scmp.ne.s32.totalorder %s97, %s113
      %p115 = scmp.eq.s32.totalorder %s21, 0
      %p116 = por %p114, %p115
      %s117 = ssub.s32 %s15, %s22
      %p118 = scmp.eq.s32.totalorder %s117, 0
      %s120 = sadd.s32 %s119, 1
      %s121 = scalar_select %p118, %s119, %s120
      %p124 = pneg %p118
      %p125 = scmp.eq.s32.totalorder %s15, 1
      %p126 = por %p124, %p125
      %p127 = scmp.ne.s32.totalorder %s119, %s122
      %p128 = scmp.eq.s32.totalorder %s15, 0
      %p129 = por %p127, %p128
      %p130 = scmp.ne.s32.totalorder %s119, %s122
      %p131 = scmp.eq.s32.totalorder %s20, 1
      %p132 = por %p130, %p131
      %p133 = scmp.ne.s32.totalorder %s122, %s123
      %p134 = scmp.eq.s32.totalorder %s20, 0
      %p135 = por %p133, %p134
      %p136 = scmp.ne.s32.totalorder %s122, %s123
      %p137 = scmp.eq.s32.totalorder %s21, 1
      %p138 = por %p136, %p137
      %p140 = scmp.ne.s32.totalorder %s123, %s139
      %p141 = scmp.eq.s32.totalorder %s21, 0
      %p142 = por %p140, %p141
      %s143 = ssub.s32 %s15, %s22
      %p144 = scmp.eq.s32.totalorder %s143, 0
      %s146 = sadd.s32 %s145, 1
      %s147 = scalar_select %p144, %s145, %s146
      %p150 = pneg %p144
      %p151 = scmp.eq.s32.totalorder %s15, 1
      %p152 = por %p150, %p151
      %p153 = scmp.ne.s32.totalorder %s145, %s148
      %p154 = scmp.eq.s32.totalorder %s15, 0
      %p155 = por %p153, %p154
      %p156 = scmp.ne.s32.totalorder %s145, %s148
      %p157 = scmp.eq.s32.totalorder %s20, 1
      %p158 = por %p156, %p157
      %p159 = scmp.ne.s32.totalorder %s148, %s149
      %p160 = scmp.eq.s32.totalorder %s20, 0
      %p161 = por %p159, %p160
      %p162 = scmp.ne.s32.totalorder %s148, %s149
      %p163 = scmp.eq.s32.totalorder %s21, 1
      %p164 = por %p162, %p163
      %p166 = scmp.ne.s32.totalorder %s149, %s165
      %p167 = scmp.eq.s32.totalorder %s21, 0
      %p168 = por %p166, %p167
      %p169 = scmp.le.s32.totalorder 1, %s15
      %p170 = scmp.lt.s32.totalorder %s15, 3
      %p171 = pnand %p169, %p170
      %p172 = pneg %p171
      // Predicated region
      $region9: #{tpu_custom_call.1} parent=5 // pred_check
        _
      $region10: #{tpu_custom_call.1} parent=5 // pred_check_branch
        %174 = sbr.rel (%p171) target = $region12
      $region11: #{tpu_custom_call.1} parent=5 // pred_region
        %s175 = ssub.s32 %s15, 1
        // Predicated region
        $region13: #{tpu_custom_call.1} parent=11 // pred_check
          %p176 = pneg %p62
        $region14: #{tpu_custom_call.1} parent=11 // pred_check_branch
          %178 = sbr.rel (%p176) target = $region16
        $region15: #{tpu_custom_call.1} parent=11 // pred_region
          _
        $region16: #{tpu_custom_call.1} parent=11 // pred_fallthru
          _
        // Predicated region
        $region17: #{tpu_custom_call.1} parent=11 // pred_check
          %p179 = pneg %p83
        $region18: #{tpu_custom_call.1} parent=11 // pred_check_branch
          %181 = sbr.rel (%p179) target = $region20
        $region19: #{tpu_custom_call.1} parent=11 // pred_region
          _
        $region20: #{tpu_custom_call.1} parent=11 // pred_fallthru
          _
      $region12: #{tpu_custom_call.1} parent=5 // pred_fallthru
        _
      %p182 = scmp.lt.s32.totalorder %s15, 2
      // Predicated region
      $region21: #{tpu_custom_call.1} parent=5 // pred_check
        %p183 = pneg %p182
      $region22: #{tpu_custom_call.1} parent=5 // pred_check_branch
        %185 = sbr.rel (%p183) target = $region24
      $region23: #{tpu_custom_call.1} parent=5 // pred_region
        // Predicated region
        $region25: #{tpu_custom_call.1} parent=23 // pred_check
          %p186 = pneg %p35
        $region26: #{tpu_custom_call.1} parent=23 // pred_check_branch
          %188 = sbr.rel (%p186) target = $region28
        $region27: #{tpu_custom_call.1} parent=23 // pred_region
          %s189 = smul.u32 16, %s15
          %p190 = scmp.lt.s32.totalorder %s189, 31
          %s191 = scalar_select %p190, %s189, 31
          %s192 = smul.addr %s191, 4
          %s193 = scalar_lea.vmem %s0, %s192
          %s194 = smul.u32 16, %s15
        $region28: #{tpu_custom_call.1} parent=23 // pred_fallthru
          _
      $region24: #{tpu_custom_call.1} parent=5 // pred_fallthru
        _
      %p195 = scmp.le.s32.totalorder 1, %s15
      %p196 = scmp.lt.s32.totalorder %s15, 3
      %p197 = pnand %p195, %p196
      %p198 = pneg %p197
      // Predicated region
      $region29: #{tpu_custom_call.1} parent=5 // pred_check
        _
      $region30: #{tpu_custom_call.1} parent=5 // pred_check_branch
        %200 = sbr.rel (%p197) target = $region32
      $region31: #{tpu_custom_call.1} parent=5 // pred_region
        %s201 = ssub.s32 %s15, 1
        %s202 = smul.u32 16, %s20
        %p203 = scmp.lt.s32.totalorder %s202, 31
        %s204 = scalar_select %p203, %s202, 31
        %s205 = smul.addr %s204, 4
        %s206 = scalar_lea.vmem %s0, %s205
        %p207 = pneg %p41
        %p208 = pneg %p38
        %p209 = pneg %p62
        %p210 = pneg %p59
        %p211 = pneg %p83
        %p212 = pneg %p80
        %p213 = pneg %p109
        %p214 = pneg %p106
        %s215 = sand.u32 %s96, 1
        %s216 = scalar_lea.sflag [#allocation3], %s215
        %s217 = sand.u32 %s96, 1
        %s218 = smul.addr %s217, 64
        %s219 = scalar_lea.vmem [#allocation2], %s218
        %p220 = pneg %p135
        %p221 = pneg %p132
        %s222 = smul.u32 16, %s20
        %p223 = scmp.lt.s32.totalorder %s222, 31
        %s224 = scalar_select %p223, %s222, 31
        %s225 = smul.addr %s224, 8
        %s226 = scalar_lea.vmem %s4, %s225
        %p227 = pneg %p161
        %p228 = pneg %p158
        %s229 = smul.u32 16, %s20
        %p230 = scmp.lt.s32.totalorder %s229, 31
        %s231 = scalar_select %p230, %s229, 31
        %s232 = smul.addr %s231, 8
        %s233 = scalar_lea.vmem %s5, %s232
        %s234 = smul.u32 16, %s20
        %p235 = scmp.lt.s32.totalorder %s234, 31
        %s236 = scalar_select %p235, %s234, 31
        %s237 = smul.addr %s236, 4
        %s238 = scalar_lea.vmem %s0, %s237
        %s239 = smul.u32 16, %s20
        %s240 = smul.u32 16, %s20
        %s241 = smul.u32 16, %s20
        %p242 = scmp.lt.s32.totalorder %s241, 31
        %s243 = scalar_select %p242, %s241, 31
        %s244 = smul.addr %s243, 8
        %s245 = scalar_lea.vmem %s4, %s244
        %s246 = smul.u32 16, %s20
        %s247 = smul.u32 16, %s20
        %p248 = scmp.lt.s32.totalorder %s247, 31
        %s249 = scalar_select %p248, %s247, 31
        %s250 = smul.addr %s249, 8
        %s251 = scalar_lea.vmem %s5, %s250
        %s252 = smul.u32 16, %s20
        %v254 = vld [vmem:[%s238] sm:$0xf]
        %v255 = vld [vmem:[%s238 + $0x4] sm:$0xf]
        %v256 = vld [vmem:[%s238 + $0x8] sm:$0xf]
        %v257 = vld [vmem:[%s238 + $0xc] sm:$0xf]
        %v258 = vld [vmem:[%s238 + $0x10] sm:$0xf]
        %v259 = vld [vmem:[%s238 + $0x14] sm:$0xf]
        %v260 = vld [vmem:[%s238 + $0x18] sm:$0xf]
        %v261 = vld [vmem:[%s238 + $0x1c] sm:$0xf]
        %v262 = vld [vmem:[%s238 + $0x20] sm:$0xf]
        %v263 = vld [vmem:[%s238 + $0x24] sm:$0xf]
        %v264 = vld [vmem:[%s238 + $0x28] sm:$0xf]
        %v265 = vld [vmem:[%s238 + $0x2c] sm:$0xf]
        %v266 = vld [vmem:[%s238 + $0x30] sm:$0xf]
        %v267 = vld [vmem:[%s238 + $0x34] sm:$0xf]
        %v268 = vld [vmem:[%s238 + $0x38] sm:$0xf]
        %v269 = vld [vmem:[%s238 + $0x3c] sm:$0xf]
        %v270 = vld [vmem:[%s1] sm:$0xf]
        %v271 = vld [vmem:[%s1 + $0x4] sm:$0xf]
        %v272 = vld [vmem:[%s1 + $0x8] sm:$0xf]
        %v273 = vld [vmem:[%s1 + $0xc] sm:$0xf]
        %v274 = vld [vmem:[%s1 + $0x10] sm:$0xf]
        %v275 = vld [vmem:[%s1 + $0x14] sm:$0xf]
        %v276 = vld [vmem:[%s1 + $0x18] sm:$0xf]
        %v277 = vld [vmem:[%s1 + $0x1c] sm:$0xf]
        %v294 = vunpack.c.l.b16 %v254
        %v295 = vunpack.c.l.b16 %v255
        %v296 = vunpack.c.l.b16 %v256
        %v297 = vunpack.c.l.b16 %v257
        %v298 = vunpack.c.l.b16 %v258
        %v299 = vunpack.c.l.b16 %v259
        %v300 = vunpack.c.l.b16 %v260
        %v301 = vunpack.c.l.b16 %v261
        %v302 = vunpack.c.l.b16 %v262
        %v303 = vunpack.c.l.b16 %v263
        %v304 = vunpack.c.l.b16 %v264
        %v305 = vunpack.c.l.b16 %v265
        %v306 = vunpack.c.l.b16 %v266
        %v307 = vunpack.c.l.b16 %v267
        %v308 = vunpack.c.l.b16 %v268
        %v309 = vunpack.c.l.b16 %v269
        %v310 = vpack.c.b16 %v295, %v294
        %v311 = vpack.c.b16 %v297, %v296
        %v312 = vpack.c.b16 %v299, %v298
        %v313 = vpack.c.b16 %v301, %v300
        %v314 = vpack.c.b16 %v303, %v302
        %v315 = vpack.c.b16 %v305, %v304
        %v316 = vpack.c.b16 %v307, %v306
        %v317 = vpack.c.b16 %v309, %v308
        %v326 = vunpack.c.l.b16 %v270
        %v327 = vunpack.c.l.b16 %v271
        %v328 = vunpack.c.l.b16 %v272
        %v329 = vunpack.c.l.b16 %v273
        %v330 = vunpack.c.l.b16 %v274
        %v331 = vunpack.c.l.b16 %v275
        %v332 = vunpack.c.l.b16 %v276
        %v333 = vunpack.c.l.b16 %v277
        %v334 = vpack.c.b16 %v327, %v326
        %v335 = vpack.c.b16 %v329, %v328
        %v336 = vpack.c.b16 %v331, %v330
        %v337 = vpack.c.b16 %v333, %v332
        %vm342 = vcmask 523264
        %v344 = vsel %vm342, %v310, 0
        %v347 = vsel %vm342, %v311, 0
        %v350 = vsel %vm342, %v312, 0
        %v353 = vsel %vm342, %v313, 0
        %v356 = vsel %vm342, %v314, 0
        %v359 = vsel %vm342, %v315, 0
        %v362 = vsel %vm342, %v316, 0
        %v365 = vsel %vm342, %v317, 0
        %367 = vmatprep.subr.bf16.mxu0 0
        %368 = vmatpush1.bf16.msra.mxu0 0
        %369 = vmatprep.subr.bf16.mxu0 0
        %370 = vmatpush1.bf16.msra.mxu0 0
        %371 = vmatprep.subr.bf16.mxu0 0
        %372 = vmatpush1.bf16.msra.mxu0 0
        %373 = vmatprep.subr.bf16.mxu0 0
        %374 = vmatpush1.bf16.msra.mxu0 0
        %375 = vmatprep.subr.bf16.mxu0 0
        %376 = vmatpush1.bf16.msra.mxu0 %v337
        %377 = vmatprep.subr.bf16.mxu0 0
        %378 = vmatpush1.bf16.msra.mxu0 %v336
        %379 = vmatprep.subr.bf16.mxu0 0
        %380 = vmatpush1.bf16.msra.mxu0 %v335
        %381 = vmatprep.subr.bf16.mxu0 0
        %382 = vmatpush1.bf16.msra.mxu0 %v334
        %383 = vmatprep.subr.bf16.mxu0 0
        %384 = vmatpush2.bf16.msra.mxu0 0
        %385 = vmatprep.subr.bf16.mxu0 0
        %386 = vmatpush2.bf16.msra.mxu0 0
        %387 = vmatprep.subr.bf16.mxu0 0
        %388 = vmatpush2.bf16.msra.mxu0 0
        %389 = vmatprep.subr.bf16.mxu0 0
        %390 = vmatpush2.bf16.msra.mxu0 0
        %391 = vmatprep.subr.bf16.mxu0 0
        %392 = vmatpush2.bf16.msra.mxu0 0
        %393 = vmatprep.subr.bf16.mxu0 0
        %394 = vmatpush2.bf16.msra.mxu0 0
        %395 = vmatprep.subr.bf16.mxu0 0
        %396 = vmatpush2.bf16.msra.mxu0 0
        %397 = vmatprep.subr.bf16.mxu0 0
        %398 = vmatpush2.bf16.msra.mxu0 0
        %399 = vmatprep.mubr.bf16.mxu0 0
        %400 = vmatmul.mubr.bf16.gmra.mxu0 %v344
        %v401 = vpop.f32.mrf.mxu0
        %v402 = vadd.f32 0.0, %v401
        %v403 = vpop.f32.mrf.mxu0
        %v404 = vpop.f32.mrf.mxu0
        %v405 = vadd.f32 0.0, %v404
        %v406 = vpop.f32.mrf.mxu0
        %407 = vmatprep.mubr.bf16.mxu0 0
        %408 = vmatmul.mubr.bf16.gmra.mxu0 %v347
        %v409 = vpop.f32.mrf.mxu0
        %v410 = vadd.f32 0.0, %v409
        %v411 = vpop.f32.mrf.mxu0
        %v412 = vpop.f32.mrf.mxu0
        %v413 = vadd.f32 0.0, %v412
        %v414 = vpop.f32.mrf.mxu0
        %415 = vmatprep.mubr.bf16.mxu0 0
        %416 = vmatmul.mubr.bf16.gmra.mxu0 %v350
        %v417 = vpop.f32.mrf.mxu0
        %v418 = vadd.f32 0.0, %v417
        %v419 = vpop.f32.mrf.mxu0
        %v420 = vpop.f32.mrf.mxu0
        %v421 = vadd.f32 0.0, %v420
        %v422 = vpop.f32.mrf.mxu0
        %423 = vmatprep.mubr.bf16.mxu0 0
        %424 = vmatmul.mubr.bf16.gmra.mxu0 %v353
        %v425 = vpop.f32.mrf.mxu0
        %v426 = vadd.f32 0.0, %v425
        %v427 = vpop.f32.mrf.mxu0
        %v428 = vpop.f32.mrf.mxu0
        %v429 = vadd.f32 0.0, %v428
        %v430 = vpop.f32.mrf.mxu0
        %431 = vmatprep.mubr.bf16.mxu0 0
        %432 = vmatmul.mubr.bf16.gmra.mxu0 %v356
        %v433 = vpop.f32.mrf.mxu0
        %v434 = vadd.f32 0.0, %v433
        %v435 = vpop.f32.mrf.mxu0
        %v436 = vpop.f32.mrf.mxu0
        %v437 = vadd.f32 0.0, %v436
        %v438 = vpop.f32.mrf.mxu0
        %439 = vmatprep.mubr.bf16.mxu0 0
        %440 = vmatmul.mubr.bf16.gmra.mxu0 %v359
        %v441 = vpop.f32.mrf.mxu0
        %v442 = vadd.f32 0.0, %v441
        %v443 = vpop.f32.mrf.mxu0
        %v444 = vpop.f32.mrf.mxu0
        %v445 = vadd.f32 0.0, %v444
        %v446 = vpop.f32.mrf.mxu0
        %447 = vmatprep.mubr.bf16.mxu0 0
        %448 = vmatmul.mubr.bf16.gmra.mxu0 %v362
        %v449 = vpop.f32.mrf.mxu0
        %v450 = vadd.f32 0.0, %v449
        %v451 = vpop.f32.mrf.mxu0
        %v452 = vpop.f32.mrf.mxu0
        %v453 = vadd.f32 0.0, %v452
        %v454 = vpop.f32.mrf.mxu0
        %455 = vmatprep.mubr.bf16.mxu0 0
        %456 = vmatmul.mubr.bf16.gmra.mxu0 %v365
        %v457 = vpop.f32.mrf.mxu0
        %v458 = vadd.f32 0.0, %v457
        %v459 = vpop.f32.mrf.mxu0
        %v460 = vpop.f32.mrf.mxu0
        %v461 = vadd.f32 0.0, %v460
        %v462 = vpop.f32.mrf.mxu0
        %463 = vdwg.mxu0
        %v464 = vld [vmem:[%s2] sm:$0xf]
        %v465 = vld [vmem:[%s2 + $0x4] sm:$0xf]
        %v466 = vld [vmem:[%s2 + $0x8] sm:$0xf]
        %v467 = vld [vmem:[%s2 + $0xc] sm:$0xf]
        %v468 = vld [vmem:[%s2 + $0x10] sm:$0xf]
        %v469 = vld [vmem:[%s2 + $0x14] sm:$0xf]
        %v470 = vld [vmem:[%s2 + $0x18] sm:$0xf]
        %v471 = vld [vmem:[%s2 + $0x1c] sm:$0xf]
        %v480 = vunpack.c.l.b16 %v464
        %v481 = vunpack.c.l.b16 %v465
        %v482 = vunpack.c.l.b16 %v466
        %v483 = vunpack.c.l.b16 %v467
        %v484 = vunpack.c.l.b16 %v468
        %v485 = vunpack.c.l.b16 %v469
        %v486 = vunpack.c.l.b16 %v470
        %v487 = vunpack.c.l.b16 %v471
        %v488 = vpack.c.b16 %v481, %v480
        %v489 = vpack.c.b16 %v483, %v482
        %v490 = vpack.c.b16 %v485, %v484
        %v491 = vpack.c.b16 %v487, %v486
        %496 = vmatprep.subr.bf16.mxu0 0
        %497 = vmatpush1.bf16.msra.mxu0 0
        %498 = vmatprep.subr.bf16.mxu0 0
        %499 = vmatpush1.bf16.msra.mxu0 0
        %500 = vmatprep.subr.bf16.mxu0 0
        %501 = vmatpush1.bf16.msra.mxu0 0
        %502 = vmatprep.subr.bf16.mxu0 0
        %503 = vmatpush1.bf16.msra.mxu0 0
        %504 = vmatprep.subr.bf16.mxu0 0
        %505 = vmatpush1.bf16.msra.mxu0 %v491
        %506 = vmatprep.subr.bf16.mxu0 0
        %507 = vmatpush1.bf16.msra.mxu0 %v490
        %508 = vmatprep.subr.bf16.mxu0 0
        %509 = vmatpush1.bf16.msra.mxu0 %v489
        %510 = vmatprep.subr.bf16.mxu0 0
        %511 = vmatpush1.bf16.msra.mxu0 %v488
        %512 = vmatprep.subr.bf16.mxu0 0
        %513 = vmatpush2.bf16.msra.mxu0 0
        %514 = vmatprep.subr.bf16.mxu0 0
        %515 = vmatpush2.bf16.msra.mxu0 0
        %516 = vmatprep.subr.bf16.mxu0 0
        %517 = vmatpush2.bf16.msra.mxu0 0
        %518 = vmatprep.subr.bf16.mxu0 0
        %519 = vmatpush2.bf16.msra.mxu0 0
        %520 = vmatprep.subr.bf16.mxu0 0
        %521 = vmatpush2.bf16.msra.mxu0 0
        %522 = vmatprep.subr.bf16.mxu0 0
        %523 = vmatpush2.bf16.msra.mxu0 0
        %524 = vmatprep.subr.bf16.mxu0 0
        %525 = vmatpush2.bf16.msra.mxu0 0
        %526 = vmatprep.subr.bf16.mxu0 0
        %527 = vmatpush2.bf16.msra.mxu0 0
        %528 = vmatprep.mubr.bf16.mxu0 0
        %529 = vmatmul.mubr.bf16.gmra.mxu0 %v344
        %v530 = vpop.f32.mrf.mxu0
        %v531 = vadd.f32 0.0, %v530
        %v532 = vpop.f32.mrf.mxu0
        %v533 = vpop.f32.mrf.mxu0
        %v534 = vadd.f32 0.0, %v533
        %v535 = vpop.f32.mrf.mxu0
        %536 = vmatprep.mubr.bf16.mxu0 0
        %537 = vmatmul.mubr.bf16.gmra.mxu0 %v347
        %v538 = vpop.f32.mrf.mxu0
        %v539 = vadd.f32 0.0, %v538
        %v540 = vpop.f32.mrf.mxu0
        %v541 = vpop.f32.mrf.mxu0
        %v542 = vadd.f32 0.0, %v541
        %v543 = vpop.f32.mrf.mxu0
        %544 = vmatprep.mubr.bf16.mxu0 0
        %545 = vmatmul.mubr.bf16.gmra.mxu0 %v350
        %v546 = vpop.f32.mrf.mxu0
        %v547 = vadd.f32 0.0, %v546
        %v548 = vpop.f32.mrf.mxu0
        %v549 = vpop.f32.mrf.mxu0
        %v550 = vadd.f32 0.0, %v549
        %v551 = vpop.f32.mrf.mxu0
        %552 = vmatprep.mubr.bf16.mxu0 0
        %553 = vmatmul.mubr.bf16.gmra.mxu0 %v353
        %v554 = vpop.f32.mrf.mxu0
        %v555 = vadd.f32 0.0, %v554
        %v556 = vpop.f32.mrf.mxu0
        %v557 = vpop.f32.mrf.mxu0
        %v558 = vadd.f32 0.0, %v557
        %v559 = vpop.f32.mrf.mxu0
        %560 = vmatprep.mubr.bf16.mxu0 0
        %561 = vmatmul.mubr.bf16.gmra.mxu0 %v356
        %v562 = vpop.f32.mrf.mxu0
        %v563 = vadd.f32 0.0, %v562
        %v564 = vpop.f32.mrf.mxu0
        %v565 = vpop.f32.mrf.mxu0
        %v566 = vadd.f32 0.0, %v565
        %v567 = vpop.f32.mrf.mxu0
        %568 = vmatprep.mubr.bf16.mxu0 0
        %569 = vmatmul.mubr.bf16.gmra.mxu0 %v359
        %v570 = vpop.f32.mrf.mxu0
        %v571 = vadd.f32 0.0, %v570
        %v572 = vpop.f32.mrf.mxu0
        %v573 = vpop.f32.mrf.mxu0
        %v574 = vadd.f32 0.0, %v573
        %v575 = vpop.f32.mrf.mxu0
        %576 = vmatprep.mubr.bf16.mxu0 0
        %577 = vmatmul.mubr.bf16.gmra.mxu0 %v362
        %v578 = vpop.f32.mrf.mxu0
        %v579 = vadd.f32 0.0, %v578
        %v580 = vpop.f32.mrf.mxu0
        %v581 = vpop.f32.mrf.mxu0
        %v582 = vadd.f32 0.0, %v581
        %v583 = vpop.f32.mrf.mxu0
        %584 = vmatprep.mubr.bf16.mxu0 0
        %585 = vmatmul.mubr.bf16.gmra.mxu0 %v365
        %v586 = vpop.f32.mrf.mxu0
        %v587 = vadd.f32 0.0, %v586
        %v588 = vpop.f32.mrf.mxu0
        %v589 = vpop.f32.mrf.mxu0
        %v590 = vadd.f32 0.0, %v589
        %v591 = vpop.f32.mrf.mxu0
        %592 = vdwg.mxu0
        %v593 = vpack.c.bf16 %v405, %v402
        %v594 = vpack.c.bf16 %v413, %v410
        %v595 = vpack.c.bf16 %v421, %v418
        %v596 = vpack.c.bf16 %v429, %v426
        %v597 = vpack.c.bf16 %v437, %v434
        %v598 = vpack.c.bf16 %v445, %v442
        %v599 = vpack.c.bf16 %v453, %v450
        %v600 = vpack.c.bf16 %v461, %v458
        %v609 = vunpack.c.l.b16 %v593
        %v610 = vunpack.c.h.b16 %v593
        %v611 = vunpack.c.l.b16 %v594
        %v612 = vunpack.c.h.b16 %v594
        %v613 = vunpack.c.l.b16 %v595
        %v614 = vunpack.c.h.b16 %v595
        %v615 = vunpack.c.l.b16 %v596
        %v616 = vunpack.c.h.b16 %v596
        %v617 = vunpack.c.l.b16 %v597
        %v618 = vunpack.c.h.b16 %v597
        %v619 = vunpack.c.l.b16 %v598
        %v620 = vunpack.c.h.b16 %v598
        %v621 = vunpack.c.l.b16 %v599
        %v622 = vunpack.c.h.b16 %v599
        %v623 = vunpack.c.l.b16 %v600
        %v624 = vunpack.c.h.b16 %v600
        %v625 = vpack.c.b16 %v609, %v609
        %v626 = vpack.c.b16 %v610, %v610
        %v627 = vpack.c.b16 %v611, %v611
        %v628 = vpack.c.b16 %v612, %v612
        %v629 = vpack.c.b16 %v613, %v613
        %v630 = vpack.c.b16 %v614, %v614
        %v631 = vpack.c.b16 %v615, %v615
        %v632 = vpack.c.b16 %v616, %v616
        %v633 = vpack.c.b16 %v617, %v617
        %v634 = vpack.c.b16 %v618, %v618
        %v635 = vpack.c.b16 %v619, %v619
        %v636 = vpack.c.b16 %v620, %v620
        %v637 = vpack.c.b16 %v621, %v621
        %v638 = vpack.c.b16 %v622, %v622
        %v639 = vpack.c.b16 %v623, %v623
        %v640 = vpack.c.b16 %v624, %v624
        %657 = vst [vmem:[%s219] sm:$0xf] %v625
        %658 = vst [vmem:[%s219 + $0x4] sm:$0xf] %v626
        %659 = vst [vmem:[%s219 + $0x8] sm:$0xf] %v627
        %660 = vst [vmem:[%s219 + $0xc] sm:$0xf] %v628
        %661 = vst [vmem:[%s219 + $0x10] sm:$0xf] %v629
        %662 = vst [vmem:[%s219 + $0x14] sm:$0xf] %v630
        %663 = vst [vmem:[%s219 + $0x18] sm:$0xf] %v631
        %664 = vst [vmem:[%s219 + $0x1c] sm:$0xf] %v632
        %665 = vst [vmem:[%s219 + $0x20] sm:$0xf] %v633
        %666 = vst [vmem:[%s219 + $0x24] sm:$0xf] %v634
        %667 = vst [vmem:[%s219 + $0x28] sm:$0xf] %v635
        %668 = vst [vmem:[%s219 + $0x2c] sm:$0xf] %v636
        %669 = vst [vmem:[%s219 + $0x30] sm:$0xf] %v637
        %670 = vst [vmem:[%s219 + $0x34] sm:$0xf] %v638
        %671 = vst [vmem:[%s219 + $0x38] sm:$0xf] %v639
        %672 = vst [vmem:[%s219 + $0x3c] sm:$0xf] %v640
        %vm673 = vcmask 31744
        %674 = vst.msk [vmem:[%s245] sm:$0xff] %vm673, %v531
        %675 = vst.msk [vmem:[%s245 + $0x8] sm:$0xff] %vm673, %v534
        %676 = vst.msk [vmem:[%s245 + $0x10] sm:$0xff] %vm673, %v539
        %677 = vst.msk [vmem:[%s245 + $0x18] sm:$0xff] %vm673, %v542
        %678 = vst.msk [vmem:[%s245 + $0x20] sm:$0xff] %vm673, %v547
        %679 = vst.msk [vmem:[%s245 + $0x28] sm:$0xff] %vm673, %v550
        %680 = vst.msk [vmem:[%s245 + $0x30] sm:$0xff] %vm673, %v555
        %681 = vst.msk [vmem:[%s245 + $0x38] sm:$0xff] %vm673, %v558
        %682 = vst.msk [vmem:[%s245 + $0x40] sm:$0xff] %vm673, %v563
        %683 = vst.msk [vmem:[%s245 + $0x48] sm:$0xff] %vm673, %v566
        %684 = vst.msk [vmem:[%s245 + $0x50] sm:$0xff] %vm673, %v571
        %685 = vst.msk [vmem:[%s245 + $0x58] sm:$0xff] %vm673, %v574
        %686 = vst.msk [vmem:[%s245 + $0x60] sm:$0xff] %vm673, %v579
        %687 = vst.msk [vmem:[%s245 + $0x68] sm:$0xff] %vm673, %v582
        %688 = vst.msk [vmem:[%s245 + $0x70] sm:$0xff] %vm673, %v587
        %689 = vst.msk [vmem:[%s245 + $0x78] sm:$0xff] %vm673, %v590
        %706 = vrot.lane.b32.xlu0 %v531, 124
        %v707 = vpop.permute.xlu0 %706
        %708 = vrot.lane.b32.xlu0 %v534, 124
        %v709 = vpop.permute.xlu0 %708
        %710 = vrot.lane.b32.xlu0 %v539, 124
        %v711 = vpop.permute.xlu0 %710
        %712 = vrot.lane.b32.xlu0 %v542, 124
        %v713 = vpop.permute.xlu0 %712
        %714 = vrot.lane.b32.xlu0 %v547, 124
        %v715 = vpop.permute.xlu0 %714
        %716 = vrot.lane.b32.xlu0 %v550, 124
        %v717 = vpop.permute.xlu0 %716
        %718 = vrot.lane.b32.xlu0 %v555, 124
        %v719 = vpop.permute.xlu0 %718
        %720 = vrot.lane.b32.xlu0 %v558, 124
        %v721 = vpop.permute.xlu0 %720
        %722 = vrot.lane.b32.xlu0 %v563, 124
        %v723 = vpop.permute.xlu0 %722
        %724 = vrot.lane.b32.xlu0 %v566, 124
        %v725 = vpop.permute.xlu0 %724
        %726 = vrot.lane.b32.xlu0 %v571, 124
        %v727 = vpop.permute.xlu0 %726
        %728 = vrot.lane.b32.xlu0 %v574, 124
        %v729 = vpop.permute.xlu0 %728
        %730 = vrot.lane.b32.xlu0 %v579, 124
        %v731 = vpop.permute.xlu0 %730
        %732 = vrot.lane.b32.xlu0 %v582, 124
        %v733 = vpop.permute.xlu0 %732
        %734 = vrot.lane.b32.xlu0 %v587, 124
        %v735 = vpop.permute.xlu0 %734
        %736 = vrot.lane.b32.xlu0 %v590, 124
        %v737 = vpop.permute.xlu0 %736
        %754 = vst.msk [vmem:[%s251] sm:$0xff] %vm673, %v707
        %755 = vst.msk [vmem:[%s251 + $0x8] sm:$0xff] %vm673, %v709
        %756 = vst.msk [vmem:[%s251 + $0x10] sm:$0xff] %vm673, %v711
        %757 = vst.msk [vmem:[%s251 + $0x18] sm:$0xff] %vm673, %v713
        %758 = vst.msk [vmem:[%s251 + $0x20] sm:$0xff] %vm673, %v715
        %759 = vst.msk [vmem:[%s251 + $0x28] sm:$0xff] %vm673, %v717
        %760 = vst.msk [vmem:[%s251 + $0x30] sm:$0xff] %vm673, %v719
        %761 = vst.msk [vmem:[%s251 + $0x38] sm:$0xff] %vm673, %v721
        %762 = vst.msk [vmem:[%s251 + $0x40] sm:$0xff] %vm673, %v723
        %763 = vst.msk [vmem:[%s251 + $0x48] sm:$0xff] %vm673, %v725
        %764 = vst.msk [vmem:[%s251 + $0x50] sm:$0xff] %vm673, %v727
        %765 = vst.msk [vmem:[%s251 + $0x58] sm:$0xff] %vm673, %v729
        %766 = vst.msk [vmem:[%s251 + $0x60] sm:$0xff] %vm673, %v731
        %767 = vst.msk [vmem:[%s251 + $0x68] sm:$0xff] %vm673, %v733
        %768 = vst.msk [vmem:[%s251 + $0x70] sm:$0xff] %vm673, %v735
        %769 = vst.msk [vmem:[%s251 + $0x78] sm:$0xff] %vm673, %v737
        %s770 = sand.u32 %s96, 1
        %s771 = scalar_lea.sflag [#allocation3], %s770
        %s772 = sand.u32 %s96, 1
        %s773 = smul.addr %s772, 64
        %s774 = scalar_lea.vmem [#allocation2], %s773
        %s775 = smul.u32 16, %s20
        %p776 = scmp.lt.s32.totalorder %s775, 31
        %s777 = scalar_select %p776, %s775, 31
        %s778 = smul.addr %s777, 8
        %s779 = scalar_lea.vmem %s4, %s778
        %s780 = smul.u32 16, %s20
        %p781 = scmp.lt.s32.totalorder %s780, 31
        %s782 = scalar_select %p781, %s780, 31
        %s783 = smul.addr %s782, 8
        %s784 = scalar_lea.vmem %s5, %s783
        // Predicated region
        $region33: #{tpu_custom_call.1} parent=31 // pred_check
          %p785 = pneg %p106
        $region34: #{tpu_custom_call.1} parent=31 // pred_check_branch
          %787 = sbr.rel (%p785) target = $region36
        $region35: #{tpu_custom_call.1} parent=31 // pred_region
          %s788 = smul.u32 16, %s20
          %s790 = ssub.s32 1024, 1024
          %791 = vsyncadd %s771, %s790
          %s792 = smul.addr %s788, 64
          %s793 = scalar_lea.hbm %s3, %s792
          %s794 = sshll.u32 %s774, 4
          %s795 = int_to_ptr.vmem [resolvable:$true] %s794
          %800 = dma.vmem_to_hbm [thread:$0]  %s795, 1024, %s793, %s771, 64, 64, 4
        $region36: #{tpu_custom_call.1} parent=31 // pred_fallthru
          _
        // Predicated region
        $region37: #{tpu_custom_call.1} parent=31 // pred_check
          %p801 = pneg %p132
        $region38: #{tpu_custom_call.1} parent=31 // pred_check_branch
          %803 = sbr.rel (%p801) target = $region40
        $region39: #{tpu_custom_call.1} parent=31 // pred_region
          %s804 = smul.u32 16, %s20
        $region40: #{tpu_custom_call.1} parent=31 // pred_fallthru
          _
        // Predicated region
        $region41: #{tpu_custom_call.1} parent=31 // pred_check
          %p805 = pneg %p158
        $region42: #{tpu_custom_call.1} parent=31 // pred_check_branch
          %807 = sbr.rel (%p805) target = $region44
        $region43: #{tpu_custom_call.1} parent=31 // pred_region
          %s808 = smul.u32 16, %s20
        $region44: #{tpu_custom_call.1} parent=31 // pred_fallthru
          _
      $region32: #{tpu_custom_call.1} parent=5 // pred_fallthru
        _
      %p809 = scmp.le.s32.totalorder 2, %s15
      // Predicated region
      $region45: #{tpu_custom_call.1} parent=5 // pred_check
        %p810 = pneg %p809
      $region46: #{tpu_custom_call.1} parent=5 // pred_check_branch
        %812 = sbr.rel (%p810) target = $region48
      $region47: #{tpu_custom_call.1} parent=5 // pred_region
        %s813 = ssub.s32 %s15, 2
        // Predicated region
        $region49: #{tpu_custom_call.1} parent=47 // pred_check
          %p814 = pneg %p112
        $region50: #{tpu_custom_call.1} parent=47 // pred_check_branch
          %816 = sbr.rel (%p814) target = $region52
        $region51: #{tpu_custom_call.1} parent=47 // pred_region
          %s817 = sand.u32 %s97, 1
          %s818 = scalar_lea.sflag [#allocation3], %s817
          %s819 = sand.u32 %s97, 1
          %s820 = smul.addr %s819, 64
          %s821 = scalar_lea.vmem [#allocation2], %s820
          %822 = dma.done %s818, 1024
        $region52: #{tpu_custom_call.1} parent=47 // pred_fallthru
          _
        // Predicated region
        $region53: #{tpu_custom_call.1} parent=47 // pred_check
          %p823 = pneg %p138
        $region54: #{tpu_custom_call.1} parent=47 // pred_check_branch
          %825 = sbr.rel (%p823) target = $region56
        $region55: #{tpu_custom_call.1} parent=47 // pred_region
          %s826 = smul.u32 16, %s21
          %p827 = scmp.lt.s32.totalorder %s826, 31
          %s828 = scalar_select %p827, %s826, 31
          %s829 = smul.addr %s828, 8
          %s830 = scalar_lea.vmem %s4, %s829
        $region56: #{tpu_custom_call.1} parent=47 // pred_fallthru
          _
        // Predicated region
        $region57: #{tpu_custom_call.1} parent=47 // pred_check
          %p831 = pneg %p164
        $region58: #{tpu_custom_call.1} parent=47 // pred_check_branch
          %833 = sbr.rel (%p831) target = $region60
        $region59: #{tpu_custom_call.1} parent=47 // pred_region
          %s834 = smul.u32 16, %s21
          %p835 = scmp.lt.s32.totalorder %s834, 31
          %s836 = scalar_select %p835, %s834, 31
          %s837 = smul.addr %s836, 8
          %s838 = scalar_lea.vmem %s5, %s837
        $region60: #{tpu_custom_call.1} parent=47 // pred_fallthru
          _
      $region48: #{tpu_custom_call.1} parent=5 // pred_fallthru
        _
    $region6: #{tpu_custom_call.1} parent=1 // loop_footer
      %s19 = sadd.s32 1, %s15
    $region7: #{tpu_custom_call.1} parent=1 // loop_footer_branch
      %14 = sbr.rel target = $region3
    $region8: #{tpu_custom_call.1} parent=1 // loop_exit
      _
    %839 = vsyncpa [#allocation3], 1
    %s840 = scalar_lea.sflag [#allocation3], 1
    %841 = vsyncpa %s840, 1

</llo_original>
